<compile_context>
chip_gen: v7x
topology: tpu7x:2x2x1
jax: 0.10.0
libtpu: 0.0.40
codegen_flags: <defaults>
</compile_context>

<pallas_src>
import jax
import jax.numpy as jnp
from jax import lax
from jax.experimental import pallas as pl
from jax.experimental.pallas import tpu as pltpu


def _warp_kernel(src_ref, flow_ref, out_ref):
    """Warp one batch element.

    src_ref  : (1, C, H, W)  source image block
    flow_ref : (1, 2, P)     flat flow block, P = H*W (ch0 = row disp, ch1 = col disp)
    out_ref  : (1, C, P)     flat warped output block
    """
    _, C, H, W = src_ref.shape
    P = out_ref.shape[-1]

    flow = flow_ref[0]                       # (2, P)
    fy = flow[0:1, :]                        # (1, P) row displacement
    fx = flow[1:2, :]                        # (1, P) col displacement

    # Recover (row, col) of every output pixel from the flat index.  Float-only
    # math; the +0.5 margin makes the floor robust to division rounding.
    p_f = lax.broadcasted_iota(jnp.int32, (1, P), 1).astype(jnp.float32)
    row_f = jnp.floor((p_f + 0.5) / jnp.float32(W))
    col_f = p_f - row_f * jnp.float32(W)

    # Sample locations in pixel coordinates (align_corners=True round-trips the
    # normalization done by SpatialTransformer_mask exactly).
    y = row_f + fy
    x = col_f + fx

    y0 = jnp.floor(y)
    x0 = jnp.floor(x)
    y1 = y0 + 1.0
    x1 = x0 + 1.0
    wy1 = y - y0
    wy0 = 1.0 - wy1
    wx1 = x - x0
    wx0 = 1.0 - wx1

    # Separable bilinear selection weights, lane-dense (last dim = P).
    # Out-of-bounds corner indices match no iota row -> zeros padding for free.
    w_iota = lax.broadcasted_iota(jnp.int32, (W, P), 0).astype(jnp.float32)
    cxt = (jnp.where(w_iota == x0, wx0, 0.0)
           + jnp.where(w_iota == x1, wx1, 0.0))          # (W, P) col weights

    h_iota = lax.broadcasted_iota(jnp.int32, (H, P), 0).astype(jnp.float32)
    ryt = (jnp.where(h_iota == y0, wy0, 0.0)
           + jnp.where(h_iota == y1, wy1, 0.0))          # (H, P) row weights

    # Column gather for all channels/rows at once on the MXU:
    #   m[c*H + h, p] = wx0[p]*src[c,h,x0[p]] + wx1[p]*src[c,h,x1[p]]
    src2d = src_ref[0].reshape(C * H, W)                              # (C*H, W)
    m = jnp.dot(src2d, cxt, preferred_element_type=jnp.float32)       # (C*H, P)

    # Row selection: elementwise multiply + cross-sublane reduce over H.
    m3 = m.reshape(C, H, P)
    out_ref[0] = jnp.sum(m3 * ryt[None, :, :], axis=1)                # (C, P)

    # TODO(synk): mode='nearest' variant of grid_sample is not implemented
    # (only the module's default bilinear mode).


@jax.jit
def spatial_transformer_mask(src, flow):
    """SpatialTransformer_mask.forward (bilinear, align_corners=True, zeros pad)."""
    B, C, H, W = src.shape
    assert flow.shape == (B, 2, H, W), "2-D transformer expects a 2-channel flow"
    P = H * W

    src = src.astype(jnp.float32)
    flow_flat = flow.astype(jnp.float32).reshape(B, 2, P)   # lane-dense layout

    out_flat = pl.pallas_call(
        _warp_kernel,
        out_shape=jax.ShapeDtypeStruct((B, C, P), jnp.float32),
        grid_spec=pltpu.PrefetchScalarGridSpec(
            num_scalar_prefetch=0,
            grid=(B,),
            in_specs=[
                pl.BlockSpec((1, C, H, W), lambda b: (b, 0, 0, 0)),
                pl.BlockSpec((1, 2, P), lambda b: (b, 0, 0)),
            ],
            out_specs=pl.BlockSpec((1, C, P), lambda b: (b, 0, 0)),
        ),
        compiler_params=pltpu.CompilerParams(
            dimension_semantics=("parallel",)),
    )(src, flow_flat)

    return out_flat.reshape(B, C, H, W)


def _reference_warp(src, flow):
    """Pure-JAX reference: bilinear grid_sample, align_corners=True, zeros pad."""
    B, C, H, W = src.shape
    rows = jnp.arange(H, dtype=jnp.float32)[:, None]
    cols = jnp.arange(W, dtype=jnp.float32)[None, :]
    y = rows[None] + flow[:, 0]
    x = cols[None] + flow[:, 1]
    y0 = jnp.floor(y)
    x0 = jnp.floor(x)
    wy1 = y - y0
    wy0 = 1.0 - wy1
    wx1 = x - x0
    wx0 = 1.0 - wx1
    y0i = y0.astype(jnp.int32)
    x0i = x0.astype(jnp.int32)
    y1i = y0i + 1
    x1i = x0i + 1
    src_flat = src.reshape(B, C, H * W)

    def corner(yi, xi, w):
        valid = (yi >= 0) & (yi < H) & (xi >= 0) & (xi < W)
        yc = jnp.clip(yi, 0, H - 1)
        xc = jnp.clip(xi, 0, W - 1)
        flat = (yc * W + xc).reshape(B, 1, H * W)
        vals = jnp.take_along_axis(
            src_flat, jnp.broadcast_to(flat, (B, C, H * W)), axis=2)
        vals = vals.reshape(B, C, H, W)
        return jnp.where(valid[:, None], w[:, None] * vals, 0.0)

    return (corner(y0i, x0i, wy0 * wx0) + corner(y0i, x1i, wy0 * wx1)
            + corner(y1i, x0i, wy1 * wx0) + corner(y1i, x1i, wy1 * wx1))


if __name__ == "__main__":
    B, C, H, W = 2, 4, 16, 16
    key = jax.random.PRNGKey(0)
    k_src, k_flow = jax.random.split(key)
    src = jax.random.normal(k_src, (B, C, H, W), dtype=jnp.float32)
    flow = jax.random.normal(k_flow, (B, 2, H, W), dtype=jnp.float32) * 3.0

    out = spatial_transformer_mask(src, flow)
    out = jax.block_until_ready(out)
    assert out.shape == (B, C, H, W)
    assert out.dtype == jnp.float32

    ref = _reference_warp(src, flow)
    err = float(jnp.max(jnp.abs(out - ref)))
    assert err < 5e-2, f"max abs error vs reference too large: {err}"

    print("KERNEL_OK")
</pallas_src>

<mosaic_0001>
module attributes {stable_mosaic.version = 11 : i64} {
  func.func @_warp_kernel(%arg0: i32, %arg1: memref<1x4x16x16xf32, #tpu.memory_space<vmem>>, %arg2: memref<1x2x256xf32, #tpu.memory_space<vmem>>, %arg3: memref<1x4x256xf32, #tpu.memory_space<vmem>>) attributes {dimension_semantics = [#tpu.dimension_semantics<parallel>], iteration_bounds = array<i64: 2>, scalar_prefetch = 0 : i64, scratch_operands = 0 : i64, tpu.core_type = #tpu.core_type<tc>, window_params = [{transform_indices = @transform_0, window_bounds = array<i64: 1, 4, 16, 16>}, {transform_indices = @transform_1, window_bounds = array<i64: 1, 2, 256>}, {transform_indices = @transform_2, window_bounds = array<i64: 1, 4, 256>}]} {
    %c0 = arith.constant 0 : index
    %c0_0 = arith.constant 0 : index
    %c0_1 = arith.constant 0 : index
    %0 = vector.load %arg2[%c0, %c0_0, %c0_1] : memref<1x2x256xf32, #tpu.memory_space<vmem>>, vector<1x2x256xf32>
    %1 = vector.shape_cast %0 : vector<1x2x256xf32> to vector<2x256xf32>
    %2 = vector.extract_strided_slice %1 {offsets = [0, 0], sizes = [1, 256], strides = [1, 1]} : vector<2x256xf32> to vector<1x256xf32>
    %3 = vector.extract_strided_slice %1 {offsets = [1, 0], sizes = [1, 256], strides = [1, 1]} : vector<2x256xf32> to vector<1x256xf32>
    %4 = tpu.iota {dimensions = array<i32: 1>} : vector<1x256xi32>
    %5 = arith.sitofp %4 : vector<1x256xi32> to vector<1x256xf32>
    %cst = arith.constant 5.000000e-01 : f32
    %6 = vector.broadcast %cst : f32 to vector<1x256xf32>
    %7 = arith.addf %5, %6 : vector<1x256xf32>
    %cst_2 = arith.constant 1.600000e+01 : f32
    %8 = vector.broadcast %cst_2 : f32 to vector<1x256xf32>
    %9 = arith.divf %7, %8 : vector<1x256xf32>
    %10 = math.floor %9 : vector<1x256xf32>
    %cst_3 = arith.constant 1.600000e+01 : f32
    %11 = vector.broadcast %cst_3 : f32 to vector<1x256xf32>
    %12 = arith.mulf %10, %11 : vector<1x256xf32>
    %13 = arith.subf %5, %12 : vector<1x256xf32>
    %14 = arith.addf %10, %2 : vector<1x256xf32>
    %15 = arith.addf %13, %3 : vector<1x256xf32>
    %16 = math.floor %14 : vector<1x256xf32>
    %17 = math.floor %15 : vector<1x256xf32>
    %cst_4 = arith.constant 1.000000e+00 : f32
    %18 = vector.broadcast %cst_4 : f32 to vector<1x256xf32>
    %19 = arith.addf %16, %18 : vector<1x256xf32>
    %cst_5 = arith.constant 1.000000e+00 : f32
    %20 = vector.broadcast %cst_5 : f32 to vector<1x256xf32>
    %21 = arith.addf %17, %20 : vector<1x256xf32>
    %22 = arith.subf %14, %16 : vector<1x256xf32>
    %cst_6 = arith.constant 1.000000e+00 : f32
    %23 = vector.broadcast %cst_6 : f32 to vector<1x256xf32>
    %24 = arith.subf %23, %22 : vector<1x256xf32>
    %25 = arith.subf %15, %17 : vector<1x256xf32>
    %cst_7 = arith.constant 1.000000e+00 : f32
    %26 = vector.broadcast %cst_7 : f32 to vector<1x256xf32>
    %27 = arith.subf %26, %25 : vector<1x256xf32>
    %28 = tpu.iota {dimensions = array<i32: 0>} : vector<16x256xi32>
    %29 = arith.sitofp %28 : vector<16x256xi32> to vector<16x256xf32>
    %30 = vector.broadcast %17 : vector<1x256xf32> to vector<16x256xf32>
    %31 = arith.cmpf oeq, %29, %30 : vector<16x256xf32>
    %cst_8 = arith.constant 0.000000e+00 : f32
    %32 = vector.shape_cast %27 : vector<1x256xf32> to vector<1x256xf32>
    %33 = vector.broadcast %32 : vector<1x256xf32> to vector<16x256xf32>
    %34 = vector.broadcast %cst_8 : f32 to vector<16x256xf32>
    %35 = arith.select %31, %33, %34 : vector<16x256xi1>, vector<16x256xf32>
    %36 = vector.broadcast %21 : vector<1x256xf32> to vector<16x256xf32>
    %37 = arith.cmpf oeq, %29, %36 : vector<16x256xf32>
    %cst_9 = arith.constant 0.000000e+00 : f32
    %38 = vector.shape_cast %25 : vector<1x256xf32> to vector<1x256xf32>
    %39 = vector.broadcast %38 : vector<1x256xf32> to vector<16x256xf32>
    %40 = vector.broadcast %cst_9 : f32 to vector<16x256xf32>
    %41 = arith.select %37, %39, %40 : vector<16x256xi1>, vector<16x256xf32>
    %42 = arith.addf %35, %41 : vector<16x256xf32>
    %43 = tpu.iota {dimensions = array<i32: 0>} : vector<16x256xi32>
    %44 = arith.sitofp %43 : vector<16x256xi32> to vector<16x256xf32>
    %45 = vector.broadcast %16 : vector<1x256xf32> to vector<16x256xf32>
    %46 = arith.cmpf oeq, %44, %45 : vector<16x256xf32>
    %cst_10 = arith.constant 0.000000e+00 : f32
    %47 = vector.shape_cast %24 : vector<1x256xf32> to vector<1x256xf32>
    %48 = vector.broadcast %47 : vector<1x256xf32> to vector<16x256xf32>
    %49 = vector.broadcast %cst_10 : f32 to vector<16x256xf32>
    %50 = arith.select %46, %48, %49 : vector<16x256xi1>, vector<16x256xf32>
    %51 = vector.broadcast %19 : vector<1x256xf32> to vector<16x256xf32>
    %52 = arith.cmpf oeq, %44, %51 : vector<16x256xf32>
    %cst_11 = arith.constant 0.000000e+00 : f32
    %53 = vector.shape_cast %22 : vector<1x256xf32> to vector<1x256xf32>
    %54 = vector.broadcast %53 : vector<1x256xf32> to vector<16x256xf32>
    %55 = vector.broadcast %cst_11 : f32 to vector<16x256xf32>
    %56 = arith.select %52, %54, %55 : vector<16x256xi1>, vector<16x256xf32>
    %57 = arith.addf %50, %56 : vector<16x256xf32>
    %c0_12 = arith.constant 0 : index
    %c0_13 = arith.constant 0 : index
    %c0_14 = arith.constant 0 : index
    %c0_15 = arith.constant 0 : index
    %58 = vector.load %arg1[%c0_12, %c0_13, %c0_14, %c0_15] : memref<1x4x16x16xf32, #tpu.memory_space<vmem>>, vector<1x4x16x16xf32>
    %59 = vector.shape_cast %58 : vector<1x4x16x16xf32> to vector<4x16x16xf32>
    %60 = vector.shape_cast %59 : vector<4x16x16xf32> to vector<64x16xf32>
    %cst_16 = arith.constant dense<0.000000e+00> : vector<64x256xf32>
    %61 = tpu.matmul %60, %42, %cst_16 {dimension_numbers = #tpu.dot_dimension_numbers<[1], [0], [0], [1], [0, 0, 1, 1], [], []>} : vector<64x16xf32>, vector<16x256xf32>, vector<64x256xf32> -> vector<64x256xf32>
    %62 = vector.shape_cast %61 : vector<64x256xf32> to vector<4x16x256xf32>
    %63 = vector.shape_cast %57 : vector<16x256xf32> to vector<1x16x256xf32>
    %64 = vector.broadcast %63 : vector<1x16x256xf32> to vector<4x16x256xf32>
    %65 = arith.mulf %62, %64 : vector<4x16x256xf32>
    %cst_17 = arith.constant dense<0.000000e+00> : vector<4x256xf32>
    %66 = vector.multi_reduction <add>, %65, %cst_17 [1] : vector<4x16x256xf32> to vector<4x256xf32>
    %c0_18 = arith.constant 0 : index
    %c0_19 = arith.constant 0 : index
    %c0_20 = arith.constant 0 : index
    %67 = vector.load %arg3[%c0_18, %c0_19, %c0_20] : memref<1x4x256xf32, #tpu.memory_space<vmem>>, vector<1x4x256xf32>
    %68 = vector.shape_cast %67 : vector<1x4x256xf32> to vector<4x256xf32>
    %69 = vector.shape_cast %66 : vector<4x256xf32> to vector<1x4x256xf32>
    tpu.vector_store %arg3[%c0_18, %c0_19, %c0_20], %69 {strides = array<i32>} : memref<1x4x256xf32, #tpu.memory_space<vmem>>, vector<1x4x256xf32>,
    return
  }
  func.func @transform_0(%arg0: i32) -> (i32, i32, i32, i32) {
    %c0_i32 = arith.constant 0 : i32
    %c0_i32_0 = arith.constant 0 : i32
    %c0_i32_1 = arith.constant 0 : i32
    %c0_i32_2 = arith.constant 0 : i32
    return %arg0, %c0_i32, %c0_i32_0, %c0_i32_1 : i32, i32, i32, i32
  }
  func.func @transform_1(%arg0: i32) -> (i32, i32, i32) {
    %c0_i32 = arith.constant 0 : i32
    %c0_i32_0 = arith.constant 0 : i32
    %c0_i32_1 = arith.constant 0 : i32
    return %arg0, %c0_i32, %c0_i32_0 : i32, i32, i32
  }
  func.func @transform_2(%arg0: i32) -> (i32, i32, i32) {
    %c0_i32 = arith.constant 0 : i32
    %c0_i32_0 = arith.constant 0 : i32
    %c0_i32_1 = arith.constant 0 : i32
    return %arg0, %c0_i32, %c0_i32_0 : i32, i32, i32
  }
}

</mosaic_0001>

<llo_original>
// kernel: spatial_transformer_mask.1
$region0: #{spatial_transformer_mask.1}
  #allocation0 [shape = 'u32[]', space=smem, size = 0x4, offset = 0x4, fixed_abs, tag = 'smem constant byte address 0x4 - core index']
  #allocation1 [shape = 'u32[144,128]{1,0:T(1,128)}', space=vmem, size = 0x12000, scoped, tag = 'internal scratch']
  %s0 = inlined_call_operand.hbm [shape: f32[2,4,16,16], index: 0, kind: input, shape index: {}]
  %s1 = inlined_call_operand.vmem [shape: f32[2,2,256], index: 1, kind: input, shape index: {}]
  %s2 = inlined_call_operand.vmem [shape: f32[2,4,256], index: 2, kind: output, shape index: {}]
  %s3 = sld [smem:[#allocation0]]
  $region45: #{spatial_transformer_mask.1} parent=0
    _
  %s5 = ssub.s32 1, %s3
  %s6 = scalar_select 0, %s5, %s3
  $region1: #{spatial_transformer_mask.1} parent=0
    #allocation2 [shape = 'u8[65536]{0}', space=vmem, size = 0x10000, scoped, tag = 'input window, operand 0']
    #allocation3 [shape = 's32[2]{0}', space=sflag, size = 0x8, scoped, tag = 'scoped memory for spatial_transformer_mask.1']
    %7 = vsyncpa [#allocation3], 0
    %s8 = scalar_lea.sflag [#allocation3], 1
    %9 = vsyncpa %s8, 0
    loop: start=0, step=1, limit=4
    $region2: #{spatial_transformer_mask.1} parent=1 // loop_pre_header
      _
    $region3: #{spatial_transformer_mask.1} parent=1 // loop_header
      %s11 = sphi 0, %s15
      %p12 = scmp.ge.s32.totalorder %s11, 4
      %s21 = sphi 0, %s23
      %s24 = sphi 0, %s21
      %s25 = sphi 0, %s24
      %s41 = sphi 0, %s25
      %s47 = sphi 0, %s49
      %s50 = sphi 0, %s47
      %s51 = sphi 0, %s50
      %s67 = sphi 0, %s51
      %s73 = sphi 0, %s75
      %s76 = sphi 0, %s73
      %s77 = sphi 0, %s76
      %s93 = sphi 0, %s77
    $region4: #{spatial_transformer_mask.1} parent=1 // loop_header_branch
      %14 = sbr.rel (%p12) target = $region8
    $region5: #{spatial_transformer_mask.1} parent=1 // loop_body
      %s16 = ssub.s32 %s11, 1
      %s17 = ssub.s32 %s11, 2
      %s18 = sadd.s32 %s11, 1
      %s19 = ssub.s32 %s11, %s18
      %p20 = scmp.eq.s32.totalorder %s19, 0
      %s22 = sadd.s32 %s21, 1
      %s23 = scalar_select %p20, %s21, %s22
      %p26 = pneg %p20
      %p27 = scmp.eq.s32.totalorder %s11, 1
      %p28 = por %p26, %p27
      %p29 = scmp.ne.s32.totalorder %s21, %s24
      %p30 = scmp.eq.s32.totalorder %s11, 0
      %p31 = por %p29, %p30
      %p32 = scmp.ne.s32.totalorder %s21, %s24
      %p33 = scmp.eq.s32.totalorder %s16, 1
      %p34 = por %p32, %p33
      %p35 = scmp.ne.s32.totalorder %s24, %s25
      %p36 = scmp.eq.s32.totalorder %s16, 0
      %p37 = por %p35, %p36
      %p38 = scmp.ne.s32.totalorder %s24, %s25
      %p39 = scmp.eq.s32.totalorder %s17, 1
      %p40 = por %p38, %p39
      %p42 = scmp.ne.s32.totalorder %s25, %s41
      %p43 = scmp.eq.s32.totalorder %s17, 0
      %p44 = por %p42, %p43
      %s45 = ssub.s32 %s11, %s18
      %p46 = scmp.eq.s32.totalorder %s45, 0
      %s48 = sadd.s32 %s47, 1
      %s49 = scalar_select %p46, %s47, %s48
      %p52 = pneg %p46
      %p53 = scmp.eq.s32.totalorder %s11, 1
      %p54 = por %p52, %p53
      %p55 = scmp.ne.s32.totalorder %s47, %s50
      %p56 = scmp.eq.s32.totalorder %s11, 0
      %p57 = por %p55, %p56
      %p58 = scmp.ne.s32.totalorder %s47, %s50
      %p59 = scmp.eq.s32.totalorder %s16, 1
      %p60 = por %p58, %p59
      %p61 = scmp.ne.s32.totalorder %s50, %s51
      %p62 = scmp.eq.s32.totalorder %s16, 0
      %p63 = por %p61, %p62
      %p64 = scmp.ne.s32.totalorder %s50, %s51
      %p65 = scmp.eq.s32.totalorder %s17, 1
      %p66 = por %p64, %p65
      %p68 = scmp.ne.s32.totalorder %s51, %s67
      %p69 = scmp.eq.s32.totalorder %s17, 0
      %p70 = por %p68, %p69
      %s71 = ssub.s32 %s11, %s18
      %p72 = scmp.eq.s32.totalorder %s71, 0
      %s74 = sadd.s32 %s73, 1
      %s75 = scalar_select %p72, %s73, %s74
      %p78 = pneg %p72
      %p79 = scmp.eq.s32.totalorder %s11, 1
      %p80 = por %p78, %p79
      %p81 = scmp.ne.s32.totalorder %s73, %s76
      %p82 = scmp.eq.s32.totalorder %s11, 0
      %p83 = por %p81, %p82
      %p84 = scmp.ne.s32.totalorder %s73, %s76
      %p85 = scmp.eq.s32.totalorder %s16, 1
      %p86 = por %p84, %p85
      %p87 = scmp.ne.s32.totalorder %s76, %s77
      %p88 = scmp.eq.s32.totalorder %s16, 0
      %p89 = por %p87, %p88
      %p90 = scmp.ne.s32.totalorder %s76, %s77
      %p91 = scmp.eq.s32.totalorder %s17, 1
      %p92 = por %p90, %p91
      %p94 = scmp.ne.s32.totalorder %s77, %s93
      %p95 = scmp.eq.s32.totalorder %s17, 0
      %p96 = por %p94, %p95
      %p97 = scmp.le.s32.totalorder 1, %s11
      %p98 = scmp.lt.s32.totalorder %s11, 3
      %p99 = pnand %p97, %p98
      %p100 = pneg %p99
      // Predicated region
      $region9: #{spatial_transformer_mask.1} parent=5 // pred_check
        _
      $region10: #{spatial_transformer_mask.1} parent=5 // pred_check_branch
        %102 = sbr.rel (%p99) target = $region12
      $region11: #{spatial_transformer_mask.1} parent=5 // pred_region
        %s103 = ssub.s32 %s11, 1
      $region12: #{spatial_transformer_mask.1} parent=5 // pred_fallthru
        _
      %p104 = scmp.lt.s32.totalorder %s11, 2
      // Predicated region
      $region13: #{spatial_transformer_mask.1} parent=5 // pred_check
        %p105 = pneg %p104
      $region14: #{spatial_transformer_mask.1} parent=5 // pred_check_branch
        %107 = sbr.rel (%p105) target = $region16
      $region15: #{spatial_transformer_mask.1} parent=5 // pred_region
        // Predicated region
        $region17: #{spatial_transformer_mask.1} parent=15 // pred_check
          %p108 = pneg %p31
        $region18: #{spatial_transformer_mask.1} parent=15 // pred_check_branch
          %110 = sbr.rel (%p108) target = $region20
        $region19: #{spatial_transformer_mask.1} parent=15 // pred_region
          %s111 = sand.u32 %s21, 1
          %s112 = scalar_lea.sflag [#allocation3], %s111
          %s113 = sand.u32 %s21, 1
          %s114 = smul.addr %s113, 64
          %s115 = scalar_lea.vmem [#allocation2], %s114
          %s117 = ssub.s32 1024, 1024
          %118 = vsyncadd %s112, %s117
          %s119 = smul.addr %s11, 8
          %s120 = smul.addr %s119, 128
          %s121 = scalar_lea.hbm %s0, %s120
          %s122 = sshll.u32 %s115, 4
          %s123 = int_to_ptr.vmem [resolvable:$true] %s122
          %128 = dma.hbm_to_vmem [thread:$0]  %s121, 1024, %s123, %s112, 128, 128, 8
        $region20: #{spatial_transformer_mask.1} parent=15 // pred_fallthru
          _
        // Predicated region
        $region21: #{spatial_transformer_mask.1} parent=15 // pred_check
          %p129 = pneg %p57
        $region22: #{spatial_transformer_mask.1} parent=15 // pred_check_branch
          %131 = sbr.rel (%p129) target = $region24
        $region23: #{spatial_transformer_mask.1} parent=15 // pred_region
          %p132 = scmp.lt.s32.totalorder %s11, 1
          %s133 = scalar_select %p132, %s11, 1
          %s134 = smul.addr %s133, 2
          %s135 = smul.addr %s134, 2
          %s136 = scalar_lea.vmem %s1, %s135
        $region24: #{spatial_transformer_mask.1} parent=15 // pred_fallthru
          _
      $region16: #{spatial_transformer_mask.1} parent=5 // pred_fallthru
        _
      %p137 = scmp.le.s32.totalorder 1, %s11
      %p138 = scmp.lt.s32.totalorder %s11, 3
      %p139 = pnand %p137, %p138
      %p140 = pneg %p139
      // Predicated region
      $region25: #{spatial_transformer_mask.1} parent=5 // pred_check
        _
      $region26: #{spatial_transformer_mask.1} parent=5 // pred_check_branch
        %142 = sbr.rel (%p139) target = $region28
      $region27: #{spatial_transformer_mask.1} parent=5 // pred_region
        %s143 = ssub.s32 %s11, 1
        %s144 = sand.u32 %s24, 1
        %s145 = scalar_lea.sflag [#allocation3], %s144
        %s146 = sand.u32 %s24, 1
        %s147 = smul.addr %s146, 64
        %s148 = scalar_lea.vmem [#allocation2], %s147
        // Predicated region
        $region29: #{spatial_transformer_mask.1} parent=27 // pred_check
          %p149 = pneg %p37
        $region30: #{spatial_transformer_mask.1} parent=27 // pred_check_branch
          %151 = sbr.rel (%p149) target = $region32
        $region31: #{spatial_transformer_mask.1} parent=27 // pred_region
          %152 = dma.done %s145, 1024
        $region32: #{spatial_transformer_mask.1} parent=27 // pred_fallthru
          _
        %s153 = sand.u32 %s24, 1
        %s154 = scalar_lea.sflag [#allocation3], %s153
        %s155 = sand.u32 %s24, 1
        %s156 = smul.addr %s155, 64
        %s157 = scalar_lea.vmem [#allocation2], %s156
        %p158 = pneg %p37
        %p159 = pneg %p34
        %p160 = scmp.lt.s32.totalorder %s16, 1
        %s161 = scalar_select %p160, %s16, 1
        %s162 = smul.addr %s161, 2
        %s163 = smul.addr %s162, 2
        %s164 = scalar_lea.vmem %s1, %s163
        %p165 = pneg %p63
        %p166 = pneg %p60
        %p167 = pneg %p89
        %p168 = pneg %p86
        %p169 = scmp.lt.s32.totalorder %s16, 1
        %s170 = scalar_select %p169, %s16, 1
        %s171 = smul.addr %s170, 2
        %s172 = smul.addr %s171, 4
        %s173 = scalar_lea.vmem %s2, %s172
        %p174 = scmp.lt.s32.totalorder %s16, 1
        %s175 = scalar_select %p174, %s16, 1
        %s176 = smul.addr %s175, 2
        %s177 = smul.addr %s176, 2
        %s178 = scalar_lea.vmem %s1, %s177
        %p179 = scmp.lt.s32.totalorder %s16, 1
        %s180 = scalar_select %p179, %s16, 1
        %s181 = smul.addr %s180, 2
        %s182 = smul.addr %s181, 4
        %s183 = scalar_lea.vmem %s2, %s182
        %v184 = vld [vmem:[%s178] sm:$0xf]
        %v185 = vlaneseq
        %v186 = vand.u32 %v185, 127
        %v187 = vadd.s32 %v186, 128
        %v188 = vcvt.s32.f32 %v186
        %v189 = vcvt.s32.f32 %v187
        %v190 = vadd.f32 %v188, 0.5
        %v191 = vadd.f32 %v189, 0.5
        %v192 = vrcp.pop 16.0
        %v193 = vmul.f32 %v190, %v192
        %v194 = vmul.f32 %v191, %v192
        %v195 = vfloor.f32 %v193
        %v196 = vfloor.f32 %v194
        %v197 = vmul.f32 %v195, 16.0
        %v198 = vmul.f32 %v196, 16.0
        %v199 = vsub.f32 %v188, %v197
        %v200 = vsub.f32 %v189, %v198
        %v202 = vlaneseq
        %v203 = vshrl.u32 %v202, 7
        %v204 = vsub.s32 0, %v203
        %v205 = vrot.slane %v184, %v204
        %v206 = vlaneseq
        %v207 = vshrl.u32 %v206, 7
        %v208 = vsub.s32 2, %v207
        %v209 = vrot.slane %v184, %v208
        %v212 = vadd.f32 %v195, %v205
        %v213 = vadd.f32 %v196, %v209
        %v214 = vlaneseq
        %v215 = vshrl.u32 %v214, 7
        %v216 = vsub.s32 1, %v215
        %v217 = vrot.slane %v184, %v216
        %v218 = vlaneseq
        %v219 = vshrl.u32 %v218, 7
        %v220 = vsub.s32 3, %v219
        %v221 = vrot.slane %v184, %v220
        %v224 = vadd.f32 %v199, %v217
        %v225 = vadd.f32 %v200, %v221
        %v226 = vfloor.f32 %v212
        %v227 = vfloor.f32 %v213
        %v228 = vfloor.f32 %v224
        %v229 = vfloor.f32 %v225
        %v230 = vadd.f32 %v226, 1.0
        %v231 = vadd.f32 %v227, 1.0
        %v232 = vadd.f32 %v228, 1.0
        %v233 = vadd.f32 %v229, 1.0
        %v234 = vsub.f32 %v212, %v226
        %v235 = vsub.f32 %v213, %v227
        %v236 = vsub.f32 1.0, %v234
        %v237 = vsub.f32 1.0, %v235
        %v238 = vsub.f32 %v224, %v228
        %v239 = vsub.f32 %v225, %v229
        %v240 = vsub.f32 1.0, %v238
        %v241 = vsub.f32 1.0, %v239
        %v242 = vlaneseq
        %v243 = vshrl.u32 %v242, 7
        %v244 = vadd.s32 %v243, 8
        %v245 = vcvt.s32.f32 %v243
        %v246 = vcvt.s32.f32 %v244
        %v247 = vlaneseq
        %v248 = vshrl.u32 %v247, 7
        %v249 = vsub.s32 0, %v248
        %v250 = vrot.slane %v228, %v249
        %v251 = vlaneseq
        %v252 = vshrl.u32 %v251, 7
        %v253 = vsub.s32 0, %v252
        %v254 = vrot.slane %v229, %v253
        %vm255 = vcmp.eq.f32.partialorder %v245, %v250
        %vm256 = vcmp.eq.f32.partialorder %v245, %v254
        %vm257 = vcmp.eq.f32.partialorder %v246, %v250
        %vm258 = vcmp.eq.f32.partialorder %v246, %v254
        %v259 = vlaneseq
        %v260 = vshrl.u32 %v259, 7
        %v261 = vsub.s32 0, %v260
        %v262 = vrot.slane %v240, %v261
        %v263 = vlaneseq
        %v264 = vshrl.u32 %v263, 7
        %v265 = vsub.s32 0, %v264
        %v266 = vrot.slane %v241, %v265
        %v267 = vsel %vm255, %v262, 0.0
        %v268 = vsel %vm256, %v266, 0.0
        %v269 = vsel %vm257, %v262, 0.0
        %v270 = vsel %vm258, %v266, 0.0
        %v271 = vlaneseq
        %v272 = vshrl.u32 %v271, 7
        %v273 = vsub.s32 0, %v272
        %v274 = vrot.slane %v232, %v273
        %v275 = vlaneseq
        %v276 = vshrl.u32 %v275, 7
        %v277 = vsub.s32 0, %v276
        %v278 = vrot.slane %v233, %v277
        %vm279 = vcmp.eq.f32.partialorder %v245, %v274
        %vm280 = vcmp.eq.f32.partialorder %v245, %v278
        %vm281 = vcmp.eq.f32.partialorder %v246, %v274
        %vm282 = vcmp.eq.f32.partialorder %v246, %v278
        %v283 = vlaneseq
        %v284 = vshrl.u32 %v283, 7
        %v285 = vsub.s32 0, %v284
        %v286 = vrot.slane %v238, %v285
        %v287 = vlaneseq
        %v288 = vshrl.u32 %v287, 7
        %v289 = vsub.s32 0, %v288
        %v290 = vrot.slane %v239, %v289
        %v291 = vsel %vm279, %v286, 0.0
        %v292 = vsel %vm280, %v290, 0.0
        %v293 = vsel %vm281, %v286, 0.0
        %v294 = vsel %vm282, %v290, 0.0
        %v295 = vadd.f32 %v267, %v291
        %v296 = vadd.f32 %v268, %v292
        %v297 = vadd.f32 %v269, %v293
        %v298 = vadd.f32 %v270, %v294
        %v299 = vlaneseq
        %v300 = vshrl.u32 %v299, 7
        %v301 = vsub.s32 0, %v300
        %v302 = vrot.slane %v226, %v301
        %v303 = vlaneseq
        %v304 = vshrl.u32 %v303, 7
        %v305 = vsub.s32 0, %v304
        %v306 = vrot.slane %v227, %v305
        %vm307 = vcmp.eq.f32.partialorder %v245, %v302
        %vm308 = vcmp.eq.f32.partialorder %v245, %v306
        %vm309 = vcmp.eq.f32.partialorder %v246, %v302
        %vm310 = vcmp.eq.f32.partialorder %v246, %v306
        %v311 = vlaneseq
        %v312 = vshrl.u32 %v311, 7
        %v313 = vsub.s32 0, %v312
        %v314 = vrot.slane %v236, %v313
        %v315 = vlaneseq
        %v316 = vshrl.u32 %v315, 7
        %v317 = vsub.s32 0, %v316
        %v318 = vrot.slane %v237, %v317
        %v319 = vsel %vm307, %v314, 0.0
        %v320 = vsel %vm308, %v318, 0.0
        %v321 = vsel %vm309, %v314, 0.0
        %v322 = vsel %vm310, %v318, 0.0
        %v323 = vlaneseq
        %v324 = vshrl.u32 %v323, 7
        %v325 = vsub.s32 0, %v324
        %v326 = vrot.slane %v230, %v325
        %v327 = vlaneseq
        %v328 = vshrl.u32 %v327, 7
        %v329 = vsub.s32 0, %v328
        %v330 = vrot.slane %v231, %v329
        %vm331 = vcmp.eq.f32.partialorder %v245, %v326
        %vm332 = vcmp.eq.f32.partialorder %v245, %v330
        %vm333 = vcmp.eq.f32.partialorder %v246, %v326
        %vm334 = vcmp.eq.f32.partialorder %v246, %v330
        %v335 = vlaneseq
        %v336 = vshrl.u32 %v335, 7
        %v337 = vsub.s32 0, %v336
        %v338 = vrot.slane %v234, %v337
        %v339 = vlaneseq
        %v340 = vshrl.u32 %v339, 7
        %v341 = vsub.s32 0, %v340
        %v342 = vrot.slane %v235, %v341
        %v343 = vsel %vm331, %v338, 0.0
        %v344 = vsel %vm332, %v342, 0.0
        %v345 = vsel %vm333, %v338, 0.0
        %v346 = vsel %vm334, %v342, 0.0
        %v347 = vadd.f32 %v319, %v343
        %v348 = vadd.f32 %v320, %v344
        %v349 = vadd.f32 %v321, %v345
        %v350 = vadd.f32 %v322, %v346
        %v351 = vld [vmem:[%s148] sm:$0xff]
        %v352 = vld [vmem:[%s148 + $0x8] sm:$0xff]
        %v353 = vld [vmem:[%s148 + $0x10] sm:$0xff]
        %v354 = vld [vmem:[%s148 + $0x18] sm:$0xff]
        %v355 = vld [vmem:[%s148 + $0x20] sm:$0xff]
        %v356 = vld [vmem:[%s148 + $0x28] sm:$0xff]
        %v357 = vld [vmem:[%s148 + $0x30] sm:$0xff]
        %v358 = vld [vmem:[%s148 + $0x38] sm:$0xff]
        %vm359 = vcmask 130048
        %v361 = vsel %vm359, %v351, 0
        %v364 = vsel %vm359, %v352, 0
        %v367 = vsel %vm359, %v353, 0
        %v370 = vsel %vm359, %v354, 0
        %v373 = vsel %vm359, %v355, 0
        %v376 = vsel %vm359, %v356, 0
        %v379 = vsel %vm359, %v357, 0
        %v382 = vsel %vm359, %v358, 0
        %384 = vmatprep.subr.mxu0 %v296
        %385 = vmatpush1.msra.mxu0 %v295
        %386 = vmatprep.subr.mxu0 %v298
        %387 = vmatpush1.msra.mxu0 %v297
        %388 = vmatprep.subr.mxu0 0.0
        %389 = vmatpush1.msra.mxu0 0.0
        %390 = vmatprep.subr.mxu0 0.0
        %391 = vmatpush1.msra.mxu0 0.0
        %392 = vmatprep.subr.mxu0 0.0
        %393 = vmatpush1.msra.mxu0 0.0
        %394 = vmatprep.subr.mxu0 0.0
        %395 = vmatpush1.msra.mxu0 0.0
        %396 = vmatprep.subr.mxu0 0.0
        %397 = vmatpush1.msra.mxu0 0.0
        %398 = vmatprep.subr.mxu0 0.0
        %399 = vmatpush1.msra.mxu0 0.0
        %400 = vmatprep.subr.mxu0 0.0
        %401 = vmatpush1.msra.mxu0 0.0
        %402 = vmatprep.subr.mxu0 0.0
        %403 = vmatpush1.msra.mxu0 0.0
        %404 = vmatprep.subr.mxu0 0.0
        %405 = vmatpush1.msra.mxu0 0.0
        %406 = vmatprep.subr.mxu0 0.0
        %407 = vmatpush1.msra.mxu0 0.0
        %408 = vmatprep.subr.mxu0 0.0
        %409 = vmatpush1.msra.mxu0 0.0
        %410 = vmatprep.subr.mxu0 0.0
        %411 = vmatpush1.msra.mxu0 0.0
        %412 = vmatprep.subr.mxu0 0.0
        %413 = vmatpush1.msra.mxu0 0.0
        %414 = vmatprep.subr.mxu0 0.0
        %415 = vmatpush1.msra.mxu0 0.0
        %416 = vmatprep.subr.mxu0 0.0
        %417 = vmatpush1.msra.mxu0 0.0
        %418 = vmatprep.subr.mxu0 0.0
        %419 = vmatpush1.msra.mxu0 0.0
        %420 = vmatprep.subr.mxu0 0.0
        %421 = vmatpush1.msra.mxu0 0.0
        %422 = vmatprep.subr.mxu0 0.0
        %423 = vmatpush1.msra.mxu0 0.0
        %424 = vmatprep.subr.mxu0 0.0
        %425 = vmatpush1.msra.mxu0 0.0
        %426 = vmatprep.subr.mxu0 0.0
        %427 = vmatpush1.msra.mxu0 0.0
        %428 = vmatprep.subr.mxu0 0.0
        %429 = vmatpush1.msra.mxu0 0.0
        %430 = vmatprep.subr.mxu0 0.0
        %431 = vmatpush1.msra.mxu0 0.0
        %432 = vmatprep.subr.mxu0 0.0
        %433 = vmatpush1.msra.mxu0 0.0
        %434 = vmatprep.subr.mxu0 0.0
        %435 = vmatpush1.msra.mxu0 0.0
        %436 = vmatprep.subr.mxu0 0.0
        %437 = vmatpush1.msra.mxu0 0.0
        %438 = vmatprep.subr.mxu0 0.0
        %439 = vmatpush1.msra.mxu0 0.0
        %440 = vmatprep.subr.mxu0 0.0
        %441 = vmatpush1.msra.mxu0 0.0
        %442 = vmatprep.subr.mxu0 0.0
        %443 = vmatpush1.msra.mxu0 0.0
        %444 = vmatprep.subr.mxu0 0.0
        %445 = vmatpush1.msra.mxu0 0.0
        %446 = vmatprep.subr.mxu0 0.0
        %447 = vmatpush1.msra.mxu0 0.0
        %448 = vmatprep.mubr.f32.mxu0 0.0
        %449 = vmatmul.mubr.f32.gmra.mrb[0].mxu0 %v361
        %v450 = vpop.f32.mrb[0].mxu0
        %v451 = vadd.f32 0.0, %v450
        %v452 = vpop.f32.mrb[0].mxu0
        %v453 = vadd.f32 0.0, %v452
        %454 = vmatprep.mubr.f32.mxu0 0.0
        %455 = vmatmul.mubr.f32.gmra.mrb[0].mxu0 %v364
        %v456 = vpop.f32.mrb[0].mxu0
        %v457 = vadd.f32 0.0, %v456
        %v458 = vpop.f32.mrb[0].mxu0
        %v459 = vadd.f32 0.0, %v458
        %460 = vmatprep.mubr.f32.mxu0 0.0
        %461 = vmatmul.mubr.f32.gmra.mrb[0].mxu0 %v367
        %v462 = vpop.f32.mrb[0].mxu0
        %v463 = vadd.f32 0.0, %v462
        %v464 = vpop.f32.mrb[0].mxu0
        %v465 = vadd.f32 0.0, %v464
        %466 = vmatprep.mubr.f32.mxu0 0.0
        %467 = vmatmul.mubr.f32.gmra.mrb[0].mxu0 %v370
        %v468 = vpop.f32.mrb[0].mxu0
        %v469 = vadd.f32 0.0, %v468
        %v470 = vpop.f32.mrb[0].mxu0
        %v471 = vadd.f32 0.0, %v470
        %472 = vmatprep.mubr.f32.mxu0 0.0
        %473 = vmatmul.mubr.f32.gmra.mrb[0].mxu0 %v373
        %v474 = vpop.f32.mrb[0].mxu0
        %v475 = vadd.f32 0.0, %v474
        %v476 = vpop.f32.mrb[0].mxu0
        %v477 = vadd.f32 0.0, %v476
        %478 = vmatprep.mubr.f32.mxu0 0.0
        %479 = vmatmul.mubr.f32.gmra.mrb[0].mxu0 %v376
        %v480 = vpop.f32.mrb[0].mxu0
        %v481 = vadd.f32 0.0, %v480
        %v482 = vpop.f32.mrb[0].mxu0
        %v483 = vadd.f32 0.0, %v482
        %484 = vmatprep.mubr.f32.mxu0 0.0
        %485 = vmatmul.mubr.f32.gmra.mrb[0].mxu0 %v379
        %v486 = vpop.f32.mrb[0].mxu0
        %v487 = vadd.f32 0.0, %v486
        %v488 = vpop.f32.mrb[0].mxu0
        %v489 = vadd.f32 0.0, %v488
        %490 = vmatprep.mubr.f32.mxu0 0.0
        %491 = vmatmul.mubr.f32.gmra.mrb[0].mxu0 %v382
        %v492 = vpop.f32.mrb[0].mxu0
        %v493 = vadd.f32 0.0, %v492
        %v494 = vpop.f32.mrb[0].mxu0
        %v495 = vadd.f32 0.0, %v494
        %496 = vdwg.mxu0
        %v497 = vmul.f32 %v451, %v347
        %v498 = vmul.f32 %v453, %v348
        %v499 = vmul.f32 %v457, %v349
        %v500 = vmul.f32 %v459, %v350
        %v501 = vmul.f32 %v463, %v347
        %v502 = vmul.f32 %v465, %v348
        %v503 = vmul.f32 %v469, %v349
        %v504 = vmul.f32 %v471, %v350
        %v505 = vmul.f32 %v475, %v347
        %v506 = vmul.f32 %v477, %v348
        %v507 = vmul.f32 %v481, %v349
        %v508 = vmul.f32 %v483, %v350
        %v509 = vmul.f32 %v487, %v347
        %v510 = vmul.f32 %v489, %v348
        %v511 = vmul.f32 %v493, %v349
        %v512 = vmul.f32 %v495, %v350
        %v513 = vadd.f32 %v497, %v499
        %v514 = vrot.slane %v513, 4
        %v515 = vadd.f32 %v513, %v514
        %v516 = vrot.slane %v515, 2
        %v517 = vadd.f32 %v515, %v516
        %v518 = vrot.slane %v517, 1
        %v519 = vadd.f32 %v517, %v518
        %v520 = vadd.f32 %v498, %v500
        %v521 = vrot.slane %v520, 4
        %v522 = vadd.f32 %v520, %v521
        %v523 = vrot.slane %v522, 2
        %v524 = vadd.f32 %v522, %v523
        %v525 = vrot.slane %v524, 1
        %v526 = vadd.f32 %v524, %v525
        %v527 = vadd.f32 %v501, %v503
        %v528 = vrot.slane %v527, 4
        %v529 = vadd.f32 %v527, %v528
        %v530 = vrot.slane %v529, 2
        %v531 = vadd.f32 %v529, %v530
        %v532 = vrot.slane %v531, 1
        %v533 = vadd.f32 %v531, %v532
        %v534 = vadd.f32 %v502, %v504
        %v535 = vrot.slane %v534, 4
        %v536 = vadd.f32 %v534, %v535
        %v537 = vrot.slane %v536, 2
        %v538 = vadd.f32 %v536, %v537
        %v539 = vrot.slane %v538, 1
        %v540 = vadd.f32 %v538, %v539
        %v541 = vadd.f32 %v505, %v507
        %v542 = vrot.slane %v541, 4
        %v543 = vadd.f32 %v541, %v542
        %v544 = vrot.slane %v543, 2
        %v545 = vadd.f32 %v543, %v544
        %v546 = vrot.slane %v545, 1
        %v547 = vadd.f32 %v545, %v546
        %v548 = vadd.f32 %v506, %v508
        %v549 = vrot.slane %v548, 4
        %v550 = vadd.f32 %v548, %v549
        %v551 = vrot.slane %v550, 2
        %v552 = vadd.f32 %v550, %v551
        %v553 = vrot.slane %v552, 1
        %v554 = vadd.f32 %v552, %v553
        %v555 = vadd.f32 %v509, %v511
        %v556 = vrot.slane %v555, 4
        %v557 = vadd.f32 %v555, %v556
        %v558 = vrot.slane %v557, 2
        %v559 = vadd.f32 %v557, %v558
        %v560 = vrot.slane %v559, 1
        %v561 = vadd.f32 %v559, %v560
        %v562 = vadd.f32 %v510, %v512
        %v563 = vrot.slane %v562, 4
        %v564 = vadd.f32 %v562, %v563
        %v565 = vrot.slane %v564, 2
        %v566 = vadd.f32 %v564, %v565
        %v567 = vrot.slane %v566, 1
        %v568 = vadd.f32 %v566, %v567
        %v577 = vcombine.low %v519, %v526
        %v578 = vcombine.low %v533, %v540
        %v579 = vcombine.low %v547, %v554
        %v580 = vcombine.low %v561, %v568
        %v581 = vrot.slane %v578, 7
        %vm582 = vcmask 1041409
        %v583 = vsel %vm582, %v581, %v577
        %vm584 = vcmask 1045509
        %v585 = vsel %vm584, %v581, %v583
        %v586 = vrot.slane %v579, 6
        %vm587 = vcmask 1042434
        %v588 = vsel %vm587, %v586, %v585
        %vm589 = vcmask 1046534
        %v590 = vsel %vm589, %v586, %v588
        %v591 = vrot.slane %v580, 5
        %vm592 = vcmask 1043459
        %v593 = vsel %vm592, %v591, %v590
        %vm594 = vcmask 1047559
        %v595 = vsel %vm594, %v591, %v593
        %597 = vst [vmem:[%s183] sm:$0xff] %v595
        %p598 = scmp.lt.s32.totalorder %s16, 1
        %s599 = scalar_select %p598, %s16, 1
        %s600 = smul.addr %s599, 2
        %s601 = smul.addr %s600, 4
        %s602 = scalar_lea.vmem %s2, %s601
        // Predicated region
        $region33: #{spatial_transformer_mask.1} parent=27 // pred_check
          %p603 = pneg %p86
        $region34: #{spatial_transformer_mask.1} parent=27 // pred_check_branch
          %605 = sbr.rel (%p603) target = $region36
        $region35: #{spatial_transformer_mask.1} parent=27 // pred_region
          _
        $region36: #{spatial_transformer_mask.1} parent=27 // pred_fallthru
          _
      $region28: #{spatial_transformer_mask.1} parent=5 // pred_fallthru
        _
      %p606 = scmp.le.s32.totalorder 2, %s11
      // Predicated region
      $region37: #{spatial_transformer_mask.1} parent=5 // pred_check
        %p607 = pneg %p606
      $region38: #{spatial_transformer_mask.1} parent=5 // pred_check_branch
        %609 = sbr.rel (%p607) target = $region40
      $region39: #{spatial_transformer_mask.1} parent=5 // pred_region
        %s610 = ssub.s32 %s11, 2
        // Predicated region
        $region41: #{spatial_transformer_mask.1} parent=39 // pred_check
          %p611 = pneg %p92
        $region42: #{spatial_transformer_mask.1} parent=39 // pred_check_branch
          %613 = sbr.rel (%p611) target = $region44
        $region43: #{spatial_transformer_mask.1} parent=39 // pred_region
          %p614 = scmp.lt.s32.totalorder %s17, 1
          %s615 = scalar_select %p614, %s17, 1
          %s616 = smul.addr %s615, 2
          %s617 = smul.addr %s616, 4
          %s618 = scalar_lea.vmem %s2, %s617
        $region44: #{spatial_transformer_mask.1} parent=39 // pred_fallthru
          _
      $region40: #{spatial_transformer_mask.1} parent=5 // pred_fallthru
        _
    $region6: #{spatial_transformer_mask.1} parent=1 // loop_footer
      %s15 = sadd.s32 1, %s11
    $region7: #{spatial_transformer_mask.1} parent=1 // loop_footer_branch
      %10 = sbr.rel target = $region3
    $region8: #{spatial_transformer_mask.1} parent=1 // loop_exit
      _
    %619 = vsyncpa [#allocation3], 1
    %s620 = scalar_lea.sflag [#allocation3], 1
    %621 = vsyncpa %s620, 1

</llo_original>
